<compile_context>
chip_gen: v6e
topology: v6e:2x2x1
jax: 0.10.0
libtpu: 0.0.40
codegen_flags: <defaults>
</compile_context>

<pallas_src>
import numpy as np
import jax
import jax.numpy as jnp
from jax import lax
from jax.experimental import pallas as pl
from jax.experimental.pallas import tpu as pltpu


def _make_kernel(NB, Cout, Cblk, n_pad, L, taps, has_bias):
    """taps: list of compile-time (tap_idx, lane_shift, needs_mask) tuples."""

    def kernel(*refs):
        x_ref = refs[0]                         # (NB, Cin, n_pad)
        m_refs = refs[1:1 + L]                  # each (NB, Cin, n_pad)
        w_ref = refs[1 + L]                     # (K*K*Cblk, Cin)
        mask_ref = refs[2 + L]                  # (K*K, n_pad)
        bias_ref = refs[3 + L] if has_bias else None   # (Cout, n_pad)
        o_ref = refs[-1]                        # (NB, Cout, n_pad)

        w = w_ref[...]
        masks_v = mask_ref[...]
        bias_v = bias_ref[...] if has_bias else None

        # Unrolled over the batch block: amortizes the fixed per-grid-step
        # overhead across NB items while keeping the lane-dense layout.
        for b in range(NB):
            # ---- elementwise hot path: x * prod(concat_list) ---------------
            prod = x_ref[b]
            for m_ref in m_refs:
                prod = prod * m_ref[b]
            prod = prod.astype(jnp.float32)

            # ---- single MXU push: channel mixing for all K*K taps ----------
            t = jnp.dot(w, prod, preferred_element_type=jnp.float32)

            # ---- spatial part of the transposed conv: rolls + masks --------
            acc = None
            for tap_idx, shift, needs_mask in taps:
                tap = t[tap_idx * Cblk:tap_idx * Cblk + Cout, :]
                if shift != 0:
                    tap = pltpu.roll(tap, shift, 1)
                if needs_mask:
                    tap = tap * masks_v[tap_idx:tap_idx + 1, :]
                acc = tap if acc is None else acc + tap
            if has_bias:
                acc = acc + bias_v
            o_ref[b] = acc.astype(o_ref.dtype)

    return kernel


def mutiply_conv_trans(x_nchw, concat_list, weight, *, stride=1, padding=1,
                       bias=None, groups=1):
    """Pallas implementation of MutiplyConvTrans.forward.

    x_nchw:      (N, Cin, H, W)
    concat_list: tensor or list of tensors with x's shape
    weight:      (Cin, Cout, K, K)  -- PyTorch ConvTranspose2d weight layout
    returns:     (N, Cout, Hout, Wout), Hout = (H-1)*stride - 2*padding + K
    """
    if not isinstance(concat_list, (list, tuple)):
        concat_list = [concat_list]
    assert stride == 1, "only stride=1 is implemented"
    assert groups == 1, "only groups=1 is implemented"

    Cin, Cout, K, _ = weight.shape
    N, C, H, W = x_nchw.shape
    assert C == Cin
    HOUT = (H - 1) * stride - 2 * padding + K
    WOUT = (W - 1) * stride - 2 * padding + K
    assert HOUT >= 1 and WOUT >= 1
    pad_eff = K - 1 - padding            # may be negative; masks handle it

    # Working grid holds both the input and the output extents.
    HG, WG = max(H, HOUT), max(W, WOUT)
    n_flat = HG * WG
    n_pad = ((n_flat + 127) // 128) * 128          # lane-aligned flat length
    L = len(concat_list)

    # Batch blocking: at most two grid steps (keeps both v7x TensorCores busy;
    # halves per-step overhead vs one-item steps on 1-TC chips); cap NB to
    # keep the double-buffered per-step VMEM footprint small.
    n_steps = 1 if N == 1 else 2
    NB = min(-(-N // n_steps), 16)
    n_steps = -(-N // NB)
    N_pad = NB * n_steps

    def prep(a):
        # Keep input dtype (no wrapper upcast); all pads are no-ops for the
        # default same-size config and are skipped entirely then.
        if (HG, WG) != (H, W):
            a = jnp.pad(a, ((0, 0), (0, 0), (0, HG - H), (0, WG - W)))
        a = a.reshape(N, Cin, n_flat)              # free reshape (contiguous)
        if n_pad > n_flat:
            # TODO(synk): fold the lane tail into the masks instead of padding.
            a = jnp.pad(a, ((0, 0), (0, 0), (0, n_pad - n_flat)))
        if N_pad > N:
            a = jnp.pad(a, ((0, N_pad - N), (0, 0), (0, 0)))
        return a

    x = prep(x_nchw)
    mults = [prep(m) for m in concat_list]

    # Effective weight: w_eff[p,q,co,ci] = weight[ci,co,K-1-p,K-1-q], flattened
    # to (K*K*Cblk, Cin), rows ordered (p, q, co) with the per-tap co block
    # padded to a multiple of 8 sublanes so in-kernel row slices stay aligned.
    Cblk = ((Cout + 7) // 8) * 8
    w_flip = jnp.flip(weight, axis=(2, 3)).astype(jnp.float32)   # (Cin,Cout,K,K)
    w_all = jnp.transpose(w_flip, (2, 3, 1, 0))                  # (K,K,Cout,Cin)
    if Cblk > Cout:
        w_all = jnp.pad(w_all, ((0, 0), (0, 0), (0, Cblk - Cout), (0, 0)))
    w_all = w_all.reshape(K * K * Cblk, Cin)

    # Compile-time tap-validity masks + static lane-roll amounts.  A mask is
    # 1.0 where tap (p,q) at an output position reads a real input pixel and
    # 0.0 in implicit zero padding / lane tail (also kills roll wrap-around).
    flat = np.arange(n_pad)
    yv, xv = flat // WG, flat % WG
    masks_np = np.zeros((K * K, n_pad), np.float32)
    taps = []
    for p in range(K):
        for q in range(K):
            dy, dx = p - pad_eff, q - pad_eff
            ok = ((yv + dy >= 0) & (yv + dy < H) &
                  (xv + dx >= 0) & (xv + dx < W) & (flat < n_flat))
            masks_np[p * K + q] = ok.astype(np.float32)
            shift = (-(dy * WG + dx)) % n_pad
            taps.append((p * K + q, shift, not bool(ok.all())))
    masks = jnp.asarray(masks_np)

    has_bias = bias is not None
    extra_inputs, extra_specs = [], []
    if has_bias:
        bias_arr = jnp.broadcast_to(
            bias.astype(jnp.float32).reshape(Cout, 1), (Cout, n_pad))
        extra_inputs = [bias_arr]
        extra_specs = [pl.BlockSpec((Cout, n_pad), lambda n: (0, 0))]

    kernel = _make_kernel(NB, Cout, Cblk, n_pad, L, taps, has_bias)

    io_spec = pl.BlockSpec((NB, Cin, n_pad), lambda n: (n, 0, 0))
    in_specs = ([io_spec] * (1 + L) +
                [pl.BlockSpec((K * K * Cblk, Cin), lambda n: (0, 0)),
                 pl.BlockSpec((K * K, n_pad), lambda n: (0, 0))] +
                extra_specs)

    out_flat = pl.pallas_call(
        kernel,
        out_shape=jax.ShapeDtypeStruct((N_pad, Cout, n_pad), x_nchw.dtype),
        grid_spec=pltpu.PrefetchScalarGridSpec(
            num_scalar_prefetch=0,
            grid=(n_steps,),
            in_specs=in_specs,
            out_specs=pl.BlockSpec((NB, Cout, n_pad), lambda n: (n, 0, 0)),
        ),
        compiler_params=pltpu.CompilerParams(
            dimension_semantics=("parallel",)),
    )(x, *mults, w_all, masks, *extra_inputs)

    # Kernel output is channels-first already; every slice below is a no-op
    # for the default same-size configuration.
    out = out_flat
    if N_pad > N:
        out = out[:N]
    if n_pad > n_flat:
        out = out[:, :, :n_flat]
    out = out.reshape(N, Cout, HG, WG)
    if (HG, WG) != (HOUT, WOUT):
        out = out[:, :, :HOUT, :WOUT]
    return out


if __name__ == "__main__":
    # Module config: MutiplyConvTrans(inplanes=4, planes=8, kernel_size=3,
    #                                 stride=1, padding=1, bias=False, groups=1)
    Cin, Cout, K, stride, padding = 4, 8, 3, 1, 1

    def reference(x, concat_list, weight, padding, bias=None):
        if not isinstance(concat_list, (list, tuple)):
            concat_list = [concat_list]
        prod = x
        for m in concat_list:
            prod = prod * m
        prod_nhwc = jnp.transpose(prod, (0, 2, 3, 1))
        w_eff = jnp.transpose(jnp.flip(weight, axis=(2, 3)), (2, 3, 0, 1))
        pe = weight.shape[2] - 1 - padding
        ref_nhwc = lax.conv_general_dilated(
            prod_nhwc, w_eff, window_strides=(1, 1),
            padding=[(pe, pe), (pe, pe)],
            dimension_numbers=("NHWC", "HWIO", "NHWC"))
        ref = jnp.transpose(ref_nhwc, (0, 3, 1, 2))
        if bias is not None:
            ref = ref + bias.reshape(1, -1, 1, 1)
        return ref

    key = jax.random.PRNGKey(0)
    kx, k1, k2, kw, kb, kx2, k3 = jax.random.split(key, 7)

    # ---- Test 1: N=2, list of two multipliers, no bias (module defaults) ----
    N, H, W = 2, 16, 16
    x = jax.random.normal(kx, (N, Cin, H, W), dtype=jnp.float32)
    concat_list = [
        jax.random.normal(k1, (N, Cin, H, W), dtype=jnp.float32),
        jax.random.normal(k2, (N, Cin, H, W), dtype=jnp.float32),
    ]
    weight = 0.1 * jax.random.normal(kw, (Cin, Cout, K, K), dtype=jnp.float32)

    out = mutiply_conv_trans(x, concat_list, weight, stride=stride,
                             padding=padding)
    out = jax.block_until_ready(out)
    ref = reference(x, concat_list, weight, padding)
    HOUT = (H - 1) * stride - 2 * padding + K
    WOUT = (W - 1) * stride - 2 * padding + K
    assert out.shape == (N, Cout, HOUT, WOUT), out.shape
    assert jnp.allclose(out, ref, atol=1e-4, rtol=1e-4), "mismatch (test 1)"

    # ---- Test 2: N=4 (exercises NB>1 batch blocking), single-tensor ---------
    # ---- multiplier, fused bias ---------------------------------------------
    N2 = 4
    x2 = jax.random.normal(kx2, (N2, Cin, H, W), dtype=jnp.float32)
    m2 = jax.random.normal(k3, (N2, Cin, H, W), dtype=jnp.float32)
    bias = 0.5 * jax.random.normal(kb, (Cout,), dtype=jnp.float32)
    out2 = mutiply_conv_trans(x2, m2, weight, stride=stride, padding=padding,
                              bias=bias)
    out2 = jax.block_until_ready(out2)
    ref2 = reference(x2, m2, weight, padding, bias=bias)
    assert out2.shape == (N2, Cout, HOUT, WOUT), out2.shape
    assert jnp.allclose(out2, ref2, atol=1e-4, rtol=1e-4), "mismatch (test 2)"

    print("KERNEL_OK")
</pallas_src>

<mosaic_0001>
module attributes {stable_mosaic.version = 11 : i64} {
  func.func @kernel(%arg0: i32, %arg1: memref<1x4x256xf32, #tpu.memory_space<vmem>>, %arg2: memref<1x4x256xf32, #tpu.memory_space<vmem>>, %arg3: memref<1x4x256xf32, #tpu.memory_space<vmem>>, %arg4: memref<72x4xf32, #tpu.memory_space<vmem>>, %arg5: memref<9x256xf32, #tpu.memory_space<vmem>>, %arg6: memref<1x8x256xf32, #tpu.memory_space<vmem>>) attributes {dimension_semantics = [#tpu.dimension_semantics<parallel>], iteration_bounds = array<i64: 2>, scalar_prefetch = 0 : i64, scratch_operands = 0 : i64, tpu.core_type = #tpu.core_type<tc>, window_params = [{transform_indices = @transform_0, window_bounds = array<i64: 1, 4, 256>}, {transform_indices = @transform_1, window_bounds = array<i64: 1, 4, 256>}, {transform_indices = @transform_2, window_bounds = array<i64: 1, 4, 256>}, {pipeline_mode = #tpu.pipeline_mode<synchronous>, transform_indices = @transform_3, window_bounds = array<i64: 72, 4>}, {pipeline_mode = #tpu.pipeline_mode<synchronous>, transform_indices = @transform_4, window_bounds = array<i64: 9, 256>}, {transform_indices = @transform_5, window_bounds = array<i64: 1, 8, 256>}]} {
    %c0 = arith.constant 0 : index
    %c0_0 = arith.constant 0 : index
    %0 = vector.load %arg4[%c0, %c0_0] : memref<72x4xf32, #tpu.memory_space<vmem>>, vector<72x4xf32>
    %c0_1 = arith.constant 0 : index
    %c0_2 = arith.constant 0 : index
    %1 = vector.load %arg5[%c0_1, %c0_2] : memref<9x256xf32, #tpu.memory_space<vmem>>, vector<9x256xf32>
    %c0_3 = arith.constant 0 : index
    %c0_4 = arith.constant 0 : index
    %c0_5 = arith.constant 0 : index
    %2 = vector.load %arg1[%c0_3, %c0_4, %c0_5] : memref<1x4x256xf32, #tpu.memory_space<vmem>>, vector<1x4x256xf32>
    %3 = vector.shape_cast %2 : vector<1x4x256xf32> to vector<4x256xf32>
    %c0_6 = arith.constant 0 : index
    %c0_7 = arith.constant 0 : index
    %c0_8 = arith.constant 0 : index
    %4 = vector.load %arg2[%c0_6, %c0_7, %c0_8] : memref<1x4x256xf32, #tpu.memory_space<vmem>>, vector<1x4x256xf32>
    %5 = vector.shape_cast %4 : vector<1x4x256xf32> to vector<4x256xf32>
    %6 = arith.mulf %3, %5 : vector<4x256xf32>
    %c0_9 = arith.constant 0 : index
    %c0_10 = arith.constant 0 : index
    %c0_11 = arith.constant 0 : index
    %7 = vector.load %arg3[%c0_9, %c0_10, %c0_11] : memref<1x4x256xf32, #tpu.memory_space<vmem>>, vector<1x4x256xf32>
    %8 = vector.shape_cast %7 : vector<1x4x256xf32> to vector<4x256xf32>
    %9 = arith.mulf %6, %8 : vector<4x256xf32>
    %cst = arith.constant dense<0.000000e+00> : vector<72x256xf32>
    %10 = tpu.matmul %0, %9, %cst {dimension_numbers = #tpu.dot_dimension_numbers<[1], [0], [0], [1], [0, 0, 1, 1], [], []>} : vector<72x4xf32>, vector<4x256xf32>, vector<72x256xf32> -> vector<72x256xf32>
    %11 = vector.extract_strided_slice %10 {offsets = [0, 0], sizes = [8, 256], strides = [1, 1]} : vector<72x256xf32> to vector<8x256xf32>
    %c17_i32 = arith.constant 17 : i32
    %12 = tpu.dynamic_rotate %11 by %c17_i32 dim 1 : vector<8x256xf32>, i32 -> vector<8x256xf32>
    %13 = vector.extract_strided_slice %1 {offsets = [0, 0], sizes = [1, 256], strides = [1, 1]} : vector<9x256xf32> to vector<1x256xf32>
    %14 = vector.broadcast %13 : vector<1x256xf32> to vector<8x256xf32>
    %15 = arith.mulf %12, %14 : vector<8x256xf32>
    %16 = vector.extract_strided_slice %10 {offsets = [8, 0], sizes = [8, 256], strides = [1, 1]} : vector<72x256xf32> to vector<8x256xf32>
    %c16_i32 = arith.constant 16 : i32
    %17 = tpu.dynamic_rotate %16 by %c16_i32 dim 1 : vector<8x256xf32>, i32 -> vector<8x256xf32>
    %18 = vector.extract_strided_slice %1 {offsets = [1, 0], sizes = [1, 256], strides = [1, 1]} : vector<9x256xf32> to vector<1x256xf32>
    %19 = vector.broadcast %18 : vector<1x256xf32> to vector<8x256xf32>
    %20 = arith.mulf %17, %19 : vector<8x256xf32>
    %21 = arith.addf %15, %20 : vector<8x256xf32>
    %22 = vector.extract_strided_slice %10 {offsets = [16, 0], sizes = [8, 256], strides = [1, 1]} : vector<72x256xf32> to vector<8x256xf32>
    %c15_i32 = arith.constant 15 : i32
    %23 = tpu.dynamic_rotate %22 by %c15_i32 dim 1 : vector<8x256xf32>, i32 -> vector<8x256xf32>
    %24 = vector.extract_strided_slice %1 {offsets = [2, 0], sizes = [1, 256], strides = [1, 1]} : vector<9x256xf32> to vector<1x256xf32>
    %25 = vector.broadcast %24 : vector<1x256xf32> to vector<8x256xf32>
    %26 = arith.mulf %23, %25 : vector<8x256xf32>
    %27 = arith.addf %21, %26 : vector<8x256xf32>
    %28 = vector.extract_strided_slice %10 {offsets = [24, 0], sizes = [8, 256], strides = [1, 1]} : vector<72x256xf32> to vector<8x256xf32>
    %c1_i32 = arith.constant 1 : i32
    %29 = tpu.dynamic_rotate %28 by %c1_i32 dim 1 : vector<8x256xf32>, i32 -> vector<8x256xf32>
    %30 = vector.extract_strided_slice %1 {offsets = [3, 0], sizes = [1, 256], strides = [1, 1]} : vector<9x256xf32> to vector<1x256xf32>
    %31 = vector.broadcast %30 : vector<1x256xf32> to vector<8x256xf32>
    %32 = arith.mulf %29, %31 : vector<8x256xf32>
    %33 = arith.addf %27, %32 : vector<8x256xf32>
    %34 = vector.extract_strided_slice %10 {offsets = [32, 0], sizes = [8, 256], strides = [1, 1]} : vector<72x256xf32> to vector<8x256xf32>
    %35 = arith.addf %33, %34 : vector<8x256xf32>
    %36 = vector.extract_strided_slice %10 {offsets = [40, 0], sizes = [8, 256], strides = [1, 1]} : vector<72x256xf32> to vector<8x256xf32>
    %c255_i32 = arith.constant 255 : i32
    %37 = tpu.dynamic_rotate %36 by %c255_i32 dim 1 : vector<8x256xf32>, i32 -> vector<8x256xf32>
    %38 = vector.extract_strided_slice %1 {offsets = [5, 0], sizes = [1, 256], strides = [1, 1]} : vector<9x256xf32> to vector<1x256xf32>
    %39 = vector.broadcast %38 : vector<1x256xf32> to vector<8x256xf32>
    %40 = arith.mulf %37, %39 : vector<8x256xf32>
    %41 = arith.addf %35, %40 : vector<8x256xf32>
    %42 = vector.extract_strided_slice %10 {offsets = [48, 0], sizes = [8, 256], strides = [1, 1]} : vector<72x256xf32> to vector<8x256xf32>
    %c241_i32 = arith.constant 241 : i32
    %43 = tpu.dynamic_rotate %42 by %c241_i32 dim 1 : vector<8x256xf32>, i32 -> vector<8x256xf32>
    %44 = vector.extract_strided_slice %1 {offsets = [6, 0], sizes = [1, 256], strides = [1, 1]} : vector<9x256xf32> to vector<1x256xf32>
    %45 = vector.broadcast %44 : vector<1x256xf32> to vector<8x256xf32>
    %46 = arith.mulf %43, %45 : vector<8x256xf32>
    %47 = arith.addf %41, %46 : vector<8x256xf32>
    %48 = vector.extract_strided_slice %10 {offsets = [56, 0], sizes = [8, 256], strides = [1, 1]} : vector<72x256xf32> to vector<8x256xf32>
    %c240_i32 = arith.constant 240 : i32
    %49 = tpu.dynamic_rotate %48 by %c240_i32 dim 1 : vector<8x256xf32>, i32 -> vector<8x256xf32>
    %50 = vector.extract_strided_slice %1 {offsets = [7, 0], sizes = [1, 256], strides = [1, 1]} : vector<9x256xf32> to vector<1x256xf32>
    %51 = vector.broadcast %50 : vector<1x256xf32> to vector<8x256xf32>
    %52 = arith.mulf %49, %51 : vector<8x256xf32>
    %53 = arith.addf %47, %52 : vector<8x256xf32>
    %54 = vector.extract_strided_slice %10 {offsets = [64, 0], sizes = [8, 256], strides = [1, 1]} : vector<72x256xf32> to vector<8x256xf32>
    %c239_i32 = arith.constant 239 : i32
    %55 = tpu.dynamic_rotate %54 by %c239_i32 dim 1 : vector<8x256xf32>, i32 -> vector<8x256xf32>
    %56 = vector.extract_strided_slice %1 {offsets = [8, 0], sizes = [1, 256], strides = [1, 1]} : vector<9x256xf32> to vector<1x256xf32>
    %57 = vector.broadcast %56 : vector<1x256xf32> to vector<8x256xf32>
    %58 = arith.mulf %55, %57 : vector<8x256xf32>
    %59 = arith.addf %53, %58 : vector<8x256xf32>
    %c0_12 = arith.constant 0 : index
    %c0_13 = arith.constant 0 : index
    %c0_14 = arith.constant 0 : index
    %60 = vector.load %arg6[%c0_12, %c0_13, %c0_14] : memref<1x8x256xf32, #tpu.memory_space<vmem>>, vector<1x8x256xf32>
    %61 = vector.shape_cast %60 : vector<1x8x256xf32> to vector<8x256xf32>
    %62 = vector.shape_cast %59 : vector<8x256xf32> to vector<1x8x256xf32>
    tpu.vector_store %arg6[%c0_12, %c0_13, %c0_14], %62 {strides = array<i32>} : memref<1x8x256xf32, #tpu.memory_space<vmem>>, vector<1x8x256xf32>,
    return
  }
  func.func @transform_0(%arg0: i32) -> (i32, i32, i32) {
    %c0_i32 = arith.constant 0 : i32
    %c0_i32_0 = arith.constant 0 : i32
    %c0_i32_1 = arith.constant 0 : i32
    return %arg0, %c0_i32, %c0_i32_0 : i32, i32, i32
  }
  func.func @transform_1(%arg0: i32) -> (i32, i32, i32) {
    %c0_i32 = arith.constant 0 : i32
    %c0_i32_0 = arith.constant 0 : i32
    %c0_i32_1 = arith.constant 0 : i32
    return %arg0, %c0_i32, %c0_i32_0 : i32, i32, i32
  }
  func.func @transform_2(%arg0: i32) -> (i32, i32, i32) {
    %c0_i32 = arith.constant 0 : i32
    %c0_i32_0 = arith.constant 0 : i32
    %c0_i32_1 = arith.constant 0 : i32
    return %arg0, %c0_i32, %c0_i32_0 : i32, i32, i32
  }
  func.func @transform_3(%arg0: i32) -> (i32, i32) {
    %c0_i32 = arith.constant 0 : i32
    %c0_i32_0 = arith.constant 0 : i32
    %c0_i32_1 = arith.constant 0 : i32
    return %c0_i32, %c0_i32_0 : i32, i32
  }
  func.func @transform_4(%arg0: i32) -> (i32, i32) {
    %c0_i32 = arith.constant 0 : i32
    %c0_i32_0 = arith.constant 0 : i32
    %c0_i32_1 = arith.constant 0 : i32
    return %c0_i32, %c0_i32_0 : i32, i32
  }
  func.func @transform_5(%arg0: i32) -> (i32, i32, i32) {
    %c0_i32 = arith.constant 0 : i32
    %c0_i32_0 = arith.constant 0 : i32
    %c0_i32_1 = arith.constant 0 : i32
    return %arg0, %c0_i32, %c0_i32_0 : i32, i32, i32
  }
}

</mosaic_0001>

<llo_original>
// kernel: tpu_custom_call.1
$region0: #{tpu_custom_call.1}
  #allocation0 [shape = 'u32[]', space=smem, size = 0x4, offset = 0x4, fixed_abs, tag = 'smem constant byte address 0x4 - core index']
  #allocation1 [shape = 'u32[144,128]{1,0:T(1,128)}', space=vmem, size = 0x12000, scoped, tag = 'internal scratch']
  %s0 = inlined_call_operand.vmem [shape: f32[2,4,256], index: 0, kind: input, shape index: {}]
  %s1 = inlined_call_operand.vmem [shape: f32[2,4,256], index: 1, kind: input, shape index: {}]
  %s2 = inlined_call_operand.hbm [shape: f32[2,4,256], index: 2, kind: input, shape index: {}]
  %s3 = inlined_call_operand.vmem [shape: f32[72,4], index: 3, kind: input, shape index: {}]
  %s4 = inlined_call_operand.vmem [shape: f32[9,256], index: 4, kind: input, shape index: {}]
  %s5 = inlined_call_operand.hbm [shape: f32[2,8,256], index: 5, kind: output, shape index: {}]
  %s6 = sld [smem:[#allocation0]]
  $region57: #{tpu_custom_call.1} parent=0
    _
  %s8 = ssub.s32 1, %s6
  %s9 = scalar_select 0, %s8, %s6
  $region1: #{tpu_custom_call.1} parent=0
    #allocation2 [shape = 'u8[8192]{0}', space=vmem, size = 0x2000, scoped, tag = 'input window, operand 2']
    #allocation3 [shape = 's32[2]{0}', space=sflag, size = 0x8, scoped, tag = 'scoped memory for tpu_custom_call.1']
    #allocation4 [shape = 's32[2]{0}', space=sflag, size = 0x8, scoped, tag = 'scoped memory for tpu_custom_call.1']
    #allocation5 [shape = 'u8[16384]{0}', space=vmem, size = 0x4000, scoped, tag = 'output window, operand 0']
    %10 = vsyncpa [#allocation3], 0
    %s11 = scalar_lea.sflag [#allocation3], 1
    %12 = vsyncpa %s11, 0
    %13 = vsyncpa [#allocation4], 0
    %s14 = scalar_lea.sflag [#allocation4], 1
    %15 = vsyncpa %s14, 0
    loop: start=0, step=1, limit=4
    $region2: #{tpu_custom_call.1} parent=1 // loop_pre_header
      _
    $region3: #{tpu_custom_call.1} parent=1 // loop_header
      %s17 = sphi 0, %s21
      %p18 = scmp.ge.s32.totalorder %s17, 4
      %s27 = sphi 0, %s29
      %s30 = sphi 0, %s27
      %s31 = sphi 0, %s30
      %s47 = sphi 0, %s31
      %s53 = sphi 0, %s55
      %s56 = sphi 0, %s53
      %s57 = sphi 0, %s56
      %s73 = sphi 0, %s57
      %s79 = sphi 0, %s81
      %s82 = sphi 0, %s79
      %s83 = sphi 0, %s82
      %s99 = sphi 0, %s83
      %s103 = sphi 0, %s103
      %s105 = sphi 0, %s103
      %s106 = sphi 0, %s105
      %s120 = sphi 0, %s106
      %s124 = sphi 0, %s124
      %s126 = sphi 0, %s124
      %s127 = sphi 0, %s126
      %s141 = sphi 0, %s127
      %s147 = sphi 0, %s149
      %s150 = sphi 0, %s147
      %s151 = sphi 0, %s150
      %s167 = sphi 0, %s151
    $region4: #{tpu_custom_call.1} parent=1 // loop_header_branch
      %20 = sbr.rel (%p18) target = $region8
    $region5: #{tpu_custom_call.1} parent=1 // loop_body
      %s22 = ssub.s32 %s17, 1
      %s23 = ssub.s32 %s17, 2
      %s24 = sadd.s32 %s17, 1
      %s25 = ssub.s32 %s17, %s24
      %p26 = scmp.eq.s32.totalorder %s25, 0
      %s28 = sadd.s32 %s27, 1
      %s29 = scalar_select %p26, %s27, %s28
      %p32 = pneg %p26
      %p33 = scmp.eq.s32.totalorder %s17, 1
      %p34 = por %p32, %p33
      %p35 = scmp.ne.s32.totalorder %s27, %s30
      %p36 = scmp.eq.s32.totalorder %s17, 0
      %p37 = por %p35, %p36
      %p38 = scmp.ne.s32.totalorder %s27, %s30
      %p39 = scmp.eq.s32.totalorder %s22, 1
      %p40 = por %p38, %p39
      %p41 = scmp.ne.s32.totalorder %s30, %s31
      %p42 = scmp.eq.s32.totalorder %s22, 0
      %p43 = por %p41, %p42
      %p44 = scmp.ne.s32.totalorder %s30, %s31
      %p45 = scmp.eq.s32.totalorder %s23, 1
      %p46 = por %p44, %p45
      %p48 = scmp.ne.s32.totalorder %s31, %s47
      %p49 = scmp.eq.s32.totalorder %s23, 0
      %p50 = por %p48, %p49
      %s51 = ssub.s32 %s17, %s24
      %p52 = scmp.eq.s32.totalorder %s51, 0
      %s54 = sadd.s32 %s53, 1
      %s55 = scalar_select %p52, %s53, %s54
      %p58 = pneg %p52
      %p59 = scmp.eq.s32.totalorder %s17, 1
      %p60 = por %p58, %p59
      %p61 = scmp.ne.s32.totalorder %s53, %s56
      %p62 = scmp.eq.s32.totalorder %s17, 0
      %p63 = por %p61, %p62
      %p64 = scmp.ne.s32.totalorder %s53, %s56
      %p65 = scmp.eq.s32.totalorder %s22, 1
      %p66 = por %p64, %p65
      %p67 = scmp.ne.s32.totalorder %s56, %s57
      %p68 = scmp.eq.s32.totalorder %s22, 0
      %p69 = por %p67, %p68
      %p70 = scmp.ne.s32.totalorder %s56, %s57
      %p71 = scmp.eq.s32.totalorder %s23, 1
      %p72 = por %p70, %p71
      %p74 = scmp.ne.s32.totalorder %s57, %s73
      %p75 = scmp.eq.s32.totalorder %s23, 0
      %p76 = por %p74, %p75
      %s77 = ssub.s32 %s17, %s24
      %p78 = scmp.eq.s32.totalorder %s77, 0
      %s80 = sadd.s32 %s79, 1
      %s81 = scalar_select %p78, %s79, %s80
      %p84 = pneg %p78
      %p85 = scmp.eq.s32.totalorder %s17, 1
      %p86 = por %p84, %p85
      %p87 = scmp.ne.s32.totalorder %s79, %s82
      %p88 = scmp.eq.s32.totalorder %s17, 0
      %p89 = por %p87, %p88
      %p90 = scmp.ne.s32.totalorder %s79, %s82
      %p91 = scmp.eq.s32.totalorder %s22, 1
      %p92 = por %p90, %p91
      %p93 = scmp.ne.s32.totalorder %s82, %s83
      %p94 = scmp.eq.s32.totalorder %s22, 0
      %p95 = por %p93, %p94
      %p96 = scmp.ne.s32.totalorder %s82, %s83
      %p97 = scmp.eq.s32.totalorder %s23, 1
      %p98 = por %p96, %p97
      %p100 = scmp.ne.s32.totalorder %s83, %s99
      %p101 = scmp.eq.s32.totalorder %s23, 0
      %p102 = por %p100, %p101
      %s104 = sadd.s32 %s103, 1
      %p107 = scmp.eq.s32.totalorder %s17, 1
      %p108 = scmp.ne.s32.totalorder %s103, %s105
      %p109 = scmp.eq.s32.totalorder %s17, 0
      %p110 = por %p108, %p109
      %p111 = scmp.ne.s32.totalorder %s103, %s105
      %p112 = scmp.eq.s32.totalorder %s22, 1
      %p113 = por %p111, %p112
      %p114 = scmp.ne.s32.totalorder %s105, %s106
      %p115 = scmp.eq.s32.totalorder %s22, 0
      %p116 = por %p114, %p115
      %p117 = scmp.ne.s32.totalorder %s105, %s106
      %p118 = scmp.eq.s32.totalorder %s23, 1
      %p119 = por %p117, %p118
      %p121 = scmp.ne.s32.totalorder %s106, %s120
      %p122 = scmp.eq.s32.totalorder %s23, 0
      %p123 = por %p121, %p122
      %s125 = sadd.s32 %s124, 1
      %p128 = scmp.eq.s32.totalorder %s17, 1
      %p129 = scmp.ne.s32.totalorder %s124, %s126
      %p130 = scmp.eq.s32.totalorder %s17, 0
      %p131 = por %p129, %p130
      %p132 = scmp.ne.s32.totalorder %s124, %s126
      %p133 = scmp.eq.s32.totalorder %s22, 1
      %p134 = por %p132, %p133
      %p135 = scmp.ne.s32.totalorder %s126, %s127
      %p136 = scmp.eq.s32.totalorder %s22, 0
      %p137 = por %p135, %p136
      %p138 = scmp.ne.s32.totalorder %s126, %s127
      %p139 = scmp.eq.s32.totalorder %s23, 1
      %p140 = por %p138, %p139
      %p142 = scmp.ne.s32.totalorder %s127, %s141
      %p143 = scmp.eq.s32.totalorder %s23, 0
      %p144 = por %p142, %p143
      %s145 = ssub.s32 %s17, %s24
      %p146 = scmp.eq.s32.totalorder %s145, 0
      %s148 = sadd.s32 %s147, 1
      %s149 = scalar_select %p146, %s147, %s148
      %p152 = pneg %p146
      %p153 = scmp.eq.s32.totalorder %s17, 1
      %p154 = por %p152, %p153
      %p155 = scmp.ne.s32.totalorder %s147, %s150
      %p156 = scmp.eq.s32.totalorder %s17, 0
      %p157 = por %p155, %p156
      %p158 = scmp.ne.s32.totalorder %s147, %s150
      %p159 = scmp.eq.s32.totalorder %s22, 1
      %p160 = por %p158, %p159
      %p161 = scmp.ne.s32.totalorder %s150, %s151
      %p162 = scmp.eq.s32.totalorder %s22, 0
      %p163 = por %p161, %p162
      %p164 = scmp.ne.s32.totalorder %s150, %s151
      %p165 = scmp.eq.s32.totalorder %s23, 1
      %p166 = por %p164, %p165
      %p168 = scmp.ne.s32.totalorder %s151, %s167
      %p169 = scmp.eq.s32.totalorder %s23, 0
      %p170 = por %p168, %p169
      %p171 = scmp.le.s32.totalorder 1, %s17
      %p172 = scmp.lt.s32.totalorder %s17, 3
      %p173 = pnand %p171, %p172
      %p174 = pneg %p173
      // Predicated region
      $region9: #{tpu_custom_call.1} parent=5 // pred_check
        _
      $region10: #{tpu_custom_call.1} parent=5 // pred_check_branch
        %176 = sbr.rel (%p173) target = $region12
      $region11: #{tpu_custom_call.1} parent=5 // pred_region
        %s177 = ssub.s32 %s17, 1
        // Predicated region
        $region13: #{tpu_custom_call.1} parent=11 // pred_check
          %p178 = pneg %p116
        $region14: #{tpu_custom_call.1} parent=11 // pred_check_branch
          %180 = sbr.rel (%p178) target = $region16
        $region15: #{tpu_custom_call.1} parent=11 // pred_region
          _
        $region16: #{tpu_custom_call.1} parent=11 // pred_fallthru
          _
        // Predicated region
        $region17: #{tpu_custom_call.1} parent=11 // pred_check
          %p181 = pneg %p137
        $region18: #{tpu_custom_call.1} parent=11 // pred_check_branch
          %183 = sbr.rel (%p181) target = $region20
        $region19: #{tpu_custom_call.1} parent=11 // pred_region
          _
        $region20: #{tpu_custom_call.1} parent=11 // pred_fallthru
          _
      $region12: #{tpu_custom_call.1} parent=5 // pred_fallthru
        _
      %p184 = scmp.lt.s32.totalorder %s17, 2
      // Predicated region
      $region21: #{tpu_custom_call.1} parent=5 // pred_check
        %p185 = pneg %p184
      $region22: #{tpu_custom_call.1} parent=5 // pred_check_branch
        %187 = sbr.rel (%p185) target = $region24
      $region23: #{tpu_custom_call.1} parent=5 // pred_region
        // Predicated region
        $region25: #{tpu_custom_call.1} parent=23 // pred_check
          %p188 = pneg %p37
        $region26: #{tpu_custom_call.1} parent=23 // pred_check_branch
          %190 = sbr.rel (%p188) target = $region28
        $region27: #{tpu_custom_call.1} parent=23 // pred_region
          %p191 = scmp.lt.s32.totalorder %s17, 1
          %s192 = scalar_select %p191, %s17, 1
          %s193 = smul.addr %s192, 2
          %s194 = smul.addr %s193, 4
          %s195 = scalar_lea.vmem %s0, %s194
        $region28: #{tpu_custom_call.1} parent=23 // pred_fallthru
          _
        // Predicated region
        $region29: #{tpu_custom_call.1} parent=23 // pred_check
          %p196 = pneg %p63
        $region30: #{tpu_custom_call.1} parent=23 // pred_check_branch
          %198 = sbr.rel (%p196) target = $region32
        $region31: #{tpu_custom_call.1} parent=23 // pred_region
          %p199 = scmp.lt.s32.totalorder %s17, 1
          %s200 = scalar_select %p199, %s17, 1
          %s201 = smul.addr %s200, 2
          %s202 = smul.addr %s201, 4
          %s203 = scalar_lea.vmem %s1, %s202
        $region32: #{tpu_custom_call.1} parent=23 // pred_fallthru
          _
        // Predicated region
        $region33: #{tpu_custom_call.1} parent=23 // pred_check
          %p204 = pneg %p89
        $region34: #{tpu_custom_call.1} parent=23 // pred_check_branch
          %206 = sbr.rel (%p204) target = $region36
        $region35: #{tpu_custom_call.1} parent=23 // pred_region
          %s207 = sand.u32 %s79, 1
          %s208 = scalar_lea.sflag [#allocation3], %s207
          %s209 = sand.u32 %s79, 1
          %s210 = smul.addr %s209, 8
          %s211 = scalar_lea.vmem [#allocation2], %s210
          %s213 = ssub.s32 128, 128
          %214 = vsyncadd %s208, %s213
          %s215 = smul.addr %s17, 2
          %s216 = smul.addr %s215, 64
          %s217 = scalar_lea.hbm %s2, %s216
          %s219 = sshll.u32 %s211, 4
          %s220 = int_to_ptr.vmem [resolvable:$true] %s219
          %222 = dma.hbm_to_vmem [thread:$0]  %s217, 128, %s220, %s208
        $region36: #{tpu_custom_call.1} parent=23 // pred_fallthru
          _
      $region24: #{tpu_custom_call.1} parent=5 // pred_fallthru
        _
      %p223 = scmp.le.s32.totalorder 1, %s17
      %p224 = scmp.lt.s32.totalorder %s17, 3
      %p225 = pnand %p223, %p224
      %p226 = pneg %p225
      // Predicated region
      $region37: #{tpu_custom_call.1} parent=5 // pred_check
        _
      $region38: #{tpu_custom_call.1} parent=5 // pred_check_branch
        %228 = sbr.rel (%p225) target = $region40
      $region39: #{tpu_custom_call.1} parent=5 // pred_region
        %s229 = ssub.s32 %s17, 1
        %s230 = sand.u32 %s82, 1
        %s231 = scalar_lea.sflag [#allocation3], %s230
        %s232 = sand.u32 %s82, 1
        %s233 = smul.addr %s232, 8
        %s234 = scalar_lea.vmem [#allocation2], %s233
        // Predicated region
        $region41: #{tpu_custom_call.1} parent=39 // pred_check
          %p235 = pneg %p95
        $region42: #{tpu_custom_call.1} parent=39 // pred_check_branch
          %237 = sbr.rel (%p235) target = $region44
        $region43: #{tpu_custom_call.1} parent=39 // pred_region
          %238 = dma.done %s231, 128
        $region44: #{tpu_custom_call.1} parent=39 // pred_fallthru
          _
        %p239 = scmp.lt.s32.totalorder %s22, 1
        %s240 = scalar_select %p239, %s22, 1
        %s241 = smul.addr %s240, 2
        %s242 = smul.addr %s241, 4
        %s243 = scalar_lea.vmem %s0, %s242
        %p244 = pneg %p43
        %p245 = pneg %p40
        %p246 = scmp.lt.s32.totalorder %s22, 1
        %s247 = scalar_select %p246, %s22, 1
        %s248 = smul.addr %s247, 2
        %s249 = smul.addr %s248, 4
        %s250 = scalar_lea.vmem %s1, %s249
        %p251 = pneg %p69
        %p252 = pneg %p66
        %s253 = sand.u32 %s82, 1
        %s254 = scalar_lea.sflag [#allocation3], %s253
        %s255 = sand.u32 %s82, 1
        %s256 = smul.addr %s255, 8
        %s257 = scalar_lea.vmem [#allocation2], %s256
        %p258 = pneg %p95
        %p259 = pneg %p92
        %p260 = pneg %p116
        %p261 = pneg %p113
        %p262 = pneg %p137
        %p263 = pneg %p134
        %p264 = pneg %p163
        %p265 = pneg %p160
        %s266 = sand.u32 %s150, 1
        %s267 = scalar_lea.sflag [#allocation4], %s266
        %s268 = sand.u32 %s150, 1
        %s269 = smul.addr %s268, 16
        %s270 = scalar_lea.vmem [#allocation5], %s269
        %p271 = scmp.lt.s32.totalorder %s22, 1
        %s272 = scalar_select %p271, %s22, 1
        %s273 = smul.addr %s272, 2
        %s274 = smul.addr %s273, 4
        %s275 = scalar_lea.vmem %s0, %s274
        %p276 = scmp.lt.s32.totalorder %s22, 1
        %s277 = scalar_select %p276, %s22, 1
        %s278 = smul.addr %s277, 2
        %s279 = smul.addr %s278, 4
        %s280 = scalar_lea.vmem %s1, %s279
        %v281 = vld [vmem:[%s3] sm:$0xff]
        %v282 = vld [vmem:[%s3 + $0x8] sm:$0xff]
        %v283 = vld [vmem:[%s3 + $0x10] sm:$0xff]
        %v284 = vld [vmem:[%s3 + $0x18] sm:$0xff]
        %v285 = vld [vmem:[%s3 + $0x20] sm:$0xff]
        %v286 = vld [vmem:[%s3 + $0x28] sm:$0xff]
        %v287 = vld [vmem:[%s3 + $0x30] sm:$0xff]
        %v288 = vld [vmem:[%s3 + $0x38] sm:$0xff]
        %v289 = vld [vmem:[%s3 + $0x40] sm:$0xff]
        %v290 = vld [vmem:[%s4] sm:$0xff]
        %v291 = vld [vmem:[%s4 + $0x8] sm:$0xff]
        %v292 = vld [vmem:[%s4 + $0x10] sm:$0x1]
        %v293 = vld [vmem:[%s4 + $0x18] sm:$0x1]
        %v294 = vld [vmem:[%s275] sm:$0xff]
        %v295 = vld [vmem:[%s280] sm:$0xff]
        %v296 = vmul.f32 %v294, %v295
        %v297 = vld [vmem:[%s234] sm:$0xff]
        %v298 = vmul.f32 %v296, %v297
        %v300 = vcombine.high %v298, %v298
        %vm301 = vcmask 31744
        %v303 = vsel %vm301, %v281, 0
        %v306 = vsel %vm301, %v282, 0
        %v309 = vsel %vm301, %v283, 0
        %v312 = vsel %vm301, %v284, 0
        %v315 = vsel %vm301, %v285, 0
        %v318 = vsel %vm301, %v286, 0
        %v321 = vsel %vm301, %v287, 0
        %v324 = vsel %vm301, %v288, 0
        %v327 = vsel %vm301, %v289, 0
        %vm329 = vcmask 1043456
        %v330 = vsel %vm329, %v298, 0
        %v332 = vsel %vm329, %v300, 0
        %334 = vmatprep.subr.mxu0 0.0
        %335 = vmatpush1.msra.mxu0 0.0
        %336 = vmatprep.subr.mxu0 0.0
        %337 = vmatpush1.msra.mxu0 0.0
        %338 = vmatprep.subr.mxu0 0.0
        %339 = vmatpush1.msra.mxu0 0.0
        %340 = vmatprep.subr.mxu0 0.0
        %341 = vmatpush1.msra.mxu0 0.0
        %342 = vmatprep.subr.mxu0 0.0
        %343 = vmatpush1.msra.mxu0 0.0
        %344 = vmatprep.subr.mxu0 0.0
        %345 = vmatpush1.msra.mxu0 0.0
        %346 = vmatprep.subr.mxu0 0.0
        %347 = vmatpush1.msra.mxu0 0.0
        %348 = vmatprep.subr.mxu0 0.0
        %349 = vmatpush1.msra.mxu0 0.0
        %350 = vmatprep.subr.mxu0 0.0
        %351 = vmatpush1.msra.mxu0 0.0
        %352 = vmatprep.subr.mxu0 0.0
        %353 = vmatpush1.msra.mxu0 0.0
        %354 = vmatprep.subr.mxu0 0.0
        %355 = vmatpush1.msra.mxu0 0.0
        %356 = vmatprep.subr.mxu0 0.0
        %357 = vmatpush1.msra.mxu0 0.0
        %358 = vmatprep.subr.mxu0 0.0
        %359 = vmatpush1.msra.mxu0 0.0
        %360 = vmatprep.subr.mxu0 0.0
        %361 = vmatpush1.msra.mxu0 0.0
        %362 = vmatprep.subr.mxu0 0.0
        %363 = vmatpush1.msra.mxu0 0.0
        %364 = vmatprep.subr.mxu0 %v332
        %365 = vmatpush1.msra.mxu0 %v330
        %366 = vmatprep.subr.mxu0 0.0
        %367 = vmatpush2.msra.mxu0 0.0
        %368 = vmatprep.subr.mxu0 0.0
        %369 = vmatpush2.msra.mxu0 0.0
        %370 = vmatprep.subr.mxu0 0.0
        %371 = vmatpush2.msra.mxu0 0.0
        %372 = vmatprep.subr.mxu0 0.0
        %373 = vmatpush2.msra.mxu0 0.0
        %374 = vmatprep.subr.mxu0 0.0
        %375 = vmatpush2.msra.mxu0 0.0
        %376 = vmatprep.subr.mxu0 0.0
        %377 = vmatpush2.msra.mxu0 0.0
        %378 = vmatprep.subr.mxu0 0.0
        %379 = vmatpush2.msra.mxu0 0.0
        %380 = vmatprep.subr.mxu0 0.0
        %381 = vmatpush2.msra.mxu0 0.0
        %382 = vmatprep.subr.mxu0 0.0
        %383 = vmatpush2.msra.mxu0 0.0
        %384 = vmatprep.subr.mxu0 0.0
        %385 = vmatpush2.msra.mxu0 0.0
        %386 = vmatprep.subr.mxu0 0.0
        %387 = vmatpush2.msra.mxu0 0.0
        %388 = vmatprep.subr.mxu0 0.0
        %389 = vmatpush2.msra.mxu0 0.0
        %390 = vmatprep.subr.mxu0 0.0
        %391 = vmatpush2.msra.mxu0 0.0
        %392 = vmatprep.subr.mxu0 0.0
        %393 = vmatpush2.msra.mxu0 0.0
        %394 = vmatprep.subr.mxu0 0.0
        %395 = vmatpush2.msra.mxu0 0.0
        %396 = vmatprep.subr.mxu0 0.0
        %397 = vmatpush2.msra.mxu0 0.0
        %398 = vmatprep.mubr.f32.mxu0 0.0
        %399 = vmatmul.mubr.f32.gmra.mxu0 %v303
        %v400 = vpop.f32.mrf.mxu0
        %v401 = vadd.f32 0.0, %v400
        %v402 = vpop.f32.mrf.mxu0
        %v403 = vadd.f32 0.0, %v402
        %404 = vmatprep.mubr.f32.mxu0 0.0
        %405 = vmatmul.mubr.f32.gmra.mxu0 %v306
        %v406 = vpop.f32.mrf.mxu0
        %v407 = vadd.f32 0.0, %v406
        %v408 = vpop.f32.mrf.mxu0
        %v409 = vadd.f32 0.0, %v408
        %410 = vmatprep.mubr.f32.mxu0 0.0
        %411 = vmatmul.mubr.f32.gmra.mxu0 %v309
        %v412 = vpop.f32.mrf.mxu0
        %v413 = vadd.f32 0.0, %v412
        %v414 = vpop.f32.mrf.mxu0
        %v415 = vadd.f32 0.0, %v414
        %416 = vmatprep.mubr.f32.mxu0 0.0
        %417 = vmatmul.mubr.f32.gmra.mxu0 %v312
        %v418 = vpop.f32.mrf.mxu0
        %v419 = vadd.f32 0.0, %v418
        %v420 = vpop.f32.mrf.mxu0
        %v421 = vadd.f32 0.0, %v420
        %422 = vmatprep.mubr.f32.mxu0 0.0
        %423 = vmatmul.mubr.f32.gmra.mxu0 %v315
        %v424 = vpop.f32.mrf.mxu0
        %v425 = vadd.f32 0.0, %v424
        %v426 = vpop.f32.mrf.mxu0
        %v427 = vadd.f32 0.0, %v426
        %428 = vmatprep.mubr.f32.mxu0 0.0
        %429 = vmatmul.mubr.f32.gmra.mxu0 %v318
        %v430 = vpop.f32.mrf.mxu0
        %v431 = vadd.f32 0.0, %v430
        %v432 = vpop.f32.mrf.mxu0
        %v433 = vadd.f32 0.0, %v432
        %434 = vmatprep.mubr.f32.mxu0 0.0
        %435 = vmatmul.mubr.f32.gmra.mxu0 %v321
        %v436 = vpop.f32.mrf.mxu0
        %v437 = vadd.f32 0.0, %v436
        %v438 = vpop.f32.mrf.mxu0
        %v439 = vadd.f32 0.0, %v438
        %440 = vmatprep.mubr.f32.mxu0 0.0
        %441 = vmatmul.mubr.f32.gmra.mxu0 %v324
        %v442 = vpop.f32.mrf.mxu0
        %v443 = vadd.f32 0.0, %v442
        %v444 = vpop.f32.mrf.mxu0
        %v445 = vadd.f32 0.0, %v444
        %446 = vmatprep.mubr.f32.mxu0 0.0
        %447 = vmatmul.mubr.f32.gmra.mxu0 %v327
        %v448 = vpop.f32.mrf.mxu0
        %v449 = vadd.f32 0.0, %v448
        %v450 = vpop.f32.mrf.mxu0
        %v451 = vadd.f32 0.0, %v450
        %452 = vdwg.mxu0
        %453 = vrot.lane.b32.xlu0 %v401, 17
        %v454 = vpop.permute.xlu0 %453
        %455 = vrot.lane.b32.xlu0 %v403, 17
        %v456 = vpop.permute.xlu0 %455
        %v457 = vlaneseq
        %v458 = vand.u32 %v457, 127
        %vm459 = vcmp.lt.s32.totalorder %v458, 17
        %v460 = vsel %vm459, %v454, %v456
        %v461 = vsel %vm459, %v456, %v454
        %v462 = vlaneseq
        %v463 = vshrl.u32 %v462, 7
        %v464 = vsub.s32 0, %v463
        %v465 = vrot.slane %v290, %v464
        %v466 = vlaneseq
        %v467 = vshrl.u32 %v466, 7
        %v468 = vsub.s32 0, %v467
        %v469 = vrot.slane %v291, %v468
        %v470 = vmul.f32 %v461, %v465
        %v471 = vmul.f32 %v460, %v469
        %472 = vrot.lane.b32.xlu0 %v407, 16
        %v473 = vpop.permute.xlu0 %472
        %474 = vrot.lane.b32.xlu0 %v409, 16
        %v475 = vpop.permute.xlu0 %474
        %vm476 = vcmp.lt.s32.totalorder %v458, 16
        %v477 = vsel %vm476, %v473, %v475
        %v478 = vsel %vm476, %v475, %v473
        %v479 = vlaneseq
        %v480 = vshrl.u32 %v479, 7
        %v481 = vsub.s32 1, %v480
        %v482 = vrot.slane %v290, %v481
        %v483 = vlaneseq
        %v484 = vshrl.u32 %v483, 7
        %v485 = vsub.s32 1, %v484
        %v486 = vrot.slane %v291, %v485
        %v487 = vmul.f32 %v478, %v482
        %v488 = vmul.f32 %v477, %v486
        %v489 = vadd.f32 %v470, %v487
        %v490 = vadd.f32 %v471, %v488
        %491 = vrot.lane.b32.xlu0 %v413, 15
        %v492 = vpop.permute.xlu0 %491
        %493 = vrot.lane.b32.xlu0 %v415, 15
        %v494 = vpop.permute.xlu0 %493
        %vm495 = vcmp.lt.s32.totalorder %v458, 15
        %v496 = vsel %vm495, %v492, %v494
        %v497 = vsel %vm495, %v494, %v492
        %v498 = vlaneseq
        %v499 = vshrl.u32 %v498, 7
        %v500 = vsub.s32 2, %v499
        %v501 = vrot.slane %v290, %v500
        %v502 = vlaneseq
        %v503 = vshrl.u32 %v502, 7
        %v504 = vsub.s32 2, %v503
        %v505 = vrot.slane %v291, %v504
        %v506 = vmul.f32 %v497, %v501
        %v507 = vmul.f32 %v496, %v505
        %v508 = vadd.f32 %v489, %v506
        %v509 = vadd.f32 %v490, %v507
        %510 = vrot.lane.b32.xlu0 %v419, 1
        %v511 = vpop.permute.xlu0 %510
        %512 = vrot.lane.b32.xlu0 %v421, 1
        %v513 = vpop.permute.xlu0 %512
        %vm514 = vcmp.lt.s32.totalorder %v458, 1
        %v515 = vsel %vm514, %v511, %v513
        %v516 = vsel %vm514, %v513, %v511
        %v517 = vlaneseq
        %v518 = vshrl.u32 %v517, 7
        %v519 = vsub.s32 3, %v518
        %v520 = vrot.slane %v290, %v519
        %v521 = vlaneseq
        %v522 = vshrl.u32 %v521, 7
        %v523 = vsub.s32 3, %v522
        %v524 = vrot.slane %v291, %v523
        %v525 = vmul.f32 %v516, %v520
        %v526 = vmul.f32 %v515, %v524
        %v527 = vadd.f32 %v508, %v525
        %v528 = vadd.f32 %v509, %v526
        %v529 = vadd.f32 %v527, %v425
        %v530 = vadd.f32 %v528, %v427
        %531 = vrot.lane.b32.xlu0 %v431, 127
        %v532 = vpop.permute.xlu0 %531
        %533 = vrot.lane.b32.xlu0 %v433, 127
        %v534 = vpop.permute.xlu0 %533
        %vm535 = vcmp.lt.s32.totalorder %v458, 127
        %v536 = vsel %vm535, %v532, %v534
        %v537 = vsel %vm535, %v534, %v532
        %v538 = vlaneseq
        %v539 = vshrl.u32 %v538, 7
        %v540 = vsub.s32 5, %v539
        %v541 = vrot.slane %v290, %v540
        %v542 = vlaneseq
        %v543 = vshrl.u32 %v542, 7
        %v544 = vsub.s32 5, %v543
        %v545 = vrot.slane %v291, %v544
        %v546 = vmul.f32 %v536, %v541
        %v547 = vmul.f32 %v537, %v545
        %v548 = vadd.f32 %v529, %v546
        %v549 = vadd.f32 %v530, %v547
        %550 = vrot.lane.b32.xlu0 %v437, 113
        %v551 = vpop.permute.xlu0 %550
        %552 = vrot.lane.b32.xlu0 %v439, 113
        %v553 = vpop.permute.xlu0 %552
        %vm554 = vcmp.lt.s32.totalorder %v458, 113
        %v555 = vsel %vm554, %v551, %v553
        %v556 = vsel %vm554, %v553, %v551
        %v557 = vlaneseq
        %v558 = vshrl.u32 %v557, 7
        %v559 = vsub.s32 6, %v558
        %v560 = vrot.slane %v290, %v559
        %v561 = vlaneseq
        %v562 = vshrl.u32 %v561, 7
        %v563 = vsub.s32 6, %v562
        %v564 = vrot.slane %v291, %v563
        %v565 = vmul.f32 %v555, %v560
        %v566 = vmul.f32 %v556, %v564
        %v567 = vadd.f32 %v548, %v565
        %v568 = vadd.f32 %v549, %v566
        %569 = vrot.lane.b32.xlu0 %v443, 112
        %v570 = vpop.permute.xlu0 %569
        %571 = vrot.lane.b32.xlu0 %v445, 112
        %v572 = vpop.permute.xlu0 %571
        %vm573 = vcmp.lt.s32.totalorder %v458, 112
        %v574 = vsel %vm573, %v570, %v572
        %v575 = vsel %vm573, %v572, %v570
        %v576 = vlaneseq
        %v577 = vshrl.u32 %v576, 7
        %v578 = vsub.s32 7, %v577
        %v579 = vrot.slane %v290, %v578
        %v580 = vlaneseq
        %v581 = vshrl.u32 %v580, 7
        %v582 = vsub.s32 7, %v581
        %v583 = vrot.slane %v291, %v582
        %v584 = vmul.f32 %v574, %v579
        %v585 = vmul.f32 %v575, %v583
        %v586 = vadd.f32 %v567, %v584
        %v587 = vadd.f32 %v568, %v585
        %588 = vrot.lane.b32.xlu0 %v449, 111
        %v589 = vpop.permute.xlu0 %588
        %590 = vrot.lane.b32.xlu0 %v451, 111
        %v591 = vpop.permute.xlu0 %590
        %vm592 = vcmp.lt.s32.totalorder %v458, 111
        %v593 = vsel %vm592, %v589, %v591
        %v594 = vsel %vm592, %v591, %v589
        %v595 = vlaneseq
        %v596 = vshrl.u32 %v595, 7
        %v597 = vsub.s32 0, %v596
        %v598 = vrot.slane %v292, %v597
        %v599 = vlaneseq
        %v600 = vshrl.u32 %v599, 7
        %v601 = vsub.s32 0, %v600
        %v602 = vrot.slane %v293, %v601
        %v603 = vmul.f32 %v593, %v598
        %v604 = vmul.f32 %v594, %v602
        %v605 = vadd.f32 %v586, %v603
        %v606 = vadd.f32 %v587, %v604
        %607 = vst [vmem:[%s270] sm:$0xff] %v605
        %608 = vst [vmem:[%s270 + $0x8] sm:$0xff] %v606
        %s609 = sand.u32 %s150, 1
        %s610 = scalar_lea.sflag [#allocation4], %s609
        %s611 = sand.u32 %s150, 1
        %s612 = smul.addr %s611, 16
        %s613 = scalar_lea.vmem [#allocation5], %s612
        // Predicated region
        $region45: #{tpu_custom_call.1} parent=39 // pred_check
          %p614 = pneg %p160
        $region46: #{tpu_custom_call.1} parent=39 // pred_check_branch
          %616 = sbr.rel (%p614) target = $region48
        $region47: #{tpu_custom_call.1} parent=39 // pred_region
          %s618 = ssub.s32 256, 256
          %619 = vsyncadd %s610, %s618
          %s620 = smul.addr %s22, 2
          %s621 = smul.addr %s620, 128
          %s622 = scalar_lea.hbm %s5, %s621
          %s624 = sshll.u32 %s613, 4
          %s625 = int_to_ptr.vmem [resolvable:$true] %s624
          %627 = dma.vmem_to_hbm [thread:$0]  %s625, 256, %s622, %s610
        $region48: #{tpu_custom_call.1} parent=39 // pred_fallthru
          _
      $region40: #{tpu_custom_call.1} parent=5 // pred_fallthru
        _
      %p628 = scmp.le.s32.totalorder 2, %s17
      // Predicated region
      $region49: #{tpu_custom_call.1} parent=5 // pred_check
        %p629 = pneg %p628
      $region50: #{tpu_custom_call.1} parent=5 // pred_check_branch
        %631 = sbr.rel (%p629) target = $region52
      $region51: #{tpu_custom_call.1} parent=5 // pred_region
        %s632 = ssub.s32 %s17, 2
        // Predicated region
        $region53: #{tpu_custom_call.1} parent=51 // pred_check
          %p633 = pneg %p166
        $region54: #{tpu_custom_call.1} parent=51 // pred_check_branch
          %635 = sbr.rel (%p633) target = $region56
        $region55: #{tpu_custom_call.1} parent=51 // pred_region
          %s636 = sand.u32 %s151, 1
          %s637 = scalar_lea.sflag [#allocation4], %s636
          %s638 = sand.u32 %s151, 1
          %s639 = smul.addr %s638, 16
          %s640 = scalar_lea.vmem [#allocation5], %s639
          %641 = dma.done %s637, 256
        $region56: #{tpu_custom_call.1} parent=51 // pred_fallthru
          _
      $region52: #{tpu_custom_call.1} parent=5 // pred_fallthru
        _
    $region6: #{tpu_custom_call.1} parent=1 // loop_footer
      %s21 = sadd.s32 1, %s17
    $region7: #{tpu_custom_call.1} parent=1 // loop_footer_branch
      %16 = sbr.rel target = $region3
    $region8: #{tpu_custom_call.1} parent=1 // loop_exit
      _
    %642 = vsyncpa [#allocation3], 1
    %s643 = scalar_lea.sflag [#allocation3], 1
    %644 = vsyncpa %s643, 1
    %645 = vsyncpa [#allocation4], 1
    %s646 = scalar_lea.sflag [#allocation4], 1
    %647 = vsyncpa %s646, 1

</llo_original>
